<compile_context>
chip_gen: v5e
topology: v5e:2x2
jax: 0.10.0
libtpu: 0.0.40
codegen_flags: <defaults>
</compile_context>

<pallas_src>
import math
import jax
import jax.numpy as jnp
from jax.experimental import pallas as pl
from jax.experimental.pallas import tpu as pltpu


def _gcn_fused_kernel(x_ref, w_ref, adj_ref, o_ref, support_ref, acc_ref):
    i = pl.program_id(0)          # output-row block
    k = pl.program_id(1)          # contraction block (support-row slab)
    nk = pl.num_programs(1)

    # First sweep over rows: materialize the k-th slab of support = x @ weight
    # into VMEM.  Every later row block (i > 0) re-uses it for free.
    @pl.when(i == 0)
    def _():
        support_ref[k] = jnp.dot(
            x_ref[...], w_ref[...], preferred_element_type=jnp.float32
        ).astype(support_ref.dtype)

    partial = jnp.dot(
        adj_ref[...], support_ref[k], preferred_element_type=jnp.float32
    )

    @pl.when(k == 0)
    def _():
        acc_ref[...] = partial

    @pl.when(k > 0)
    def _():
        acc_ref[...] += partial

    @pl.when(k == nk - 1)
    def _():
        o_ref[...] = acc_ref[...].astype(o_ref.dtype)


def _pick_k_block(N, F_in, F_out, itemsize, resident_budget=6 * 1024 * 1024):
    """Contraction tile: full extent when x + support comfortably fit in VMEM,
    otherwise the largest 128-aligned divisor of N (<= 2048)."""
    if N * (F_in + F_out) * itemsize <= resident_budget:
        return N
    t = (min(N, 2048) // 128) * 128
    while t >= 128:
        if N % t == 0:
            return t
        t -= 128
    # TODO(synk): no 128-aligned divisor of N -> untiled contraction fallback;
    # a masked-edge variant would be needed to tile truly awkward N.
    return N


def _pick_row_block(N, F_in, F_out, tk, nk, op_isz, out_isz,
                    budget=12 * 1024 * 1024):
    """Largest adj/output row block whose double-buffered working set fits a
    conservative VMEM budget (safe under default scoped limits on v5e/v6e/v7x)."""
    fixed = 2 * F_in * F_out * op_isz          # weight (double-buffered)
    fixed += 2 * tk * F_in * op_isz            # x slab (double-buffered)
    fixed += nk * tk * F_out * op_isz          # resident support scratch
    per_row = 2 * tk * op_isz + 2 * F_out * out_isz + 4 * F_out
    tm = (budget - fixed) // per_row
    if tm >= N:
        return N
    return max(8, (int(tm) // 8) * 8)


def graph_convolution_forward(x, adj, weight, *, row_block=None, k_block=None,
                              operand_dtype=None):
    """output = adj @ (x @ weight), fused into a single Pallas TPU kernel.

    operand_dtype: optionally cast x/adj/weight (e.g. jnp.bfloat16) at the
    kernel boundary; accumulation stays f32, output keeps x's original dtype.
    """
    N, F_in = x.shape
    assert weight.shape[0] == F_in, "weight/in_size mismatch"
    F_out = weight.shape[1]
    assert adj.shape == (N, N), "adj must be (N, N)"

    out_dtype = x.dtype
    if operand_dtype is not None:
        x = x.astype(operand_dtype)
        adj = adj.astype(operand_dtype)
        weight = weight.astype(operand_dtype)
    op_dtype = x.dtype
    op_isz = jnp.dtype(op_dtype).itemsize
    out_isz = jnp.dtype(out_dtype).itemsize

    # ---- contraction tile (rows of support / columns of adj) ----------------
    if k_block is not None:
        ok = (k_block == N) or (N % k_block == 0 and k_block % 128 == 0)
        tk = k_block if ok else N
    else:
        tk = _pick_k_block(N, F_in, F_out, op_isz)
    nk = N // tk

    # ---- output-row tile -----------------------------------------------------
    if row_block is None:
        tm = _pick_row_block(N, F_in, F_out, tk, nk, op_isz, out_isz)
    else:
        tm = row_block
    tm = min(tm, N)
    if tm != N:
        tm = max(8, (tm // 8) * 8)
    ni = pl.cdiv(N, tm)

    # x is only consumed while i == 0.  For i > 0 the index_map pins itself to
    # the slab fetched last, so the pipeline issues no further x DMAs.
    if nk == 1:
        x_index = lambda i, k: (0, 0)
    else:
        x_index = lambda i, k: (jnp.where(i == 0, k, nk - 1), 0)

    cost = pl.CostEstimate(
        flops=2 * N * F_in * F_out + 2 * N * N * F_out,
        transcendentals=0,
        bytes_accessed=op_isz * (N * F_in + F_in * F_out + N * N)
        + out_isz * N * F_out,
    )

    return pl.pallas_call(
        _gcn_fused_kernel,
        out_shape=jax.ShapeDtypeStruct((N, F_out), out_dtype),
        grid_spec=pltpu.PrefetchScalarGridSpec(
            num_scalar_prefetch=0,
            grid=(ni, nk),
            in_specs=[
                pl.BlockSpec((tk, F_in), x_index),                 # x slab
                pl.BlockSpec((F_in, F_out), lambda i, k: (0, 0)),  # weight (resident)
                pl.BlockSpec((tm, tk), lambda i, k: (i, k)),       # adj tile
            ],
            out_specs=pl.BlockSpec((tm, F_out), lambda i, k: (i, 0)),
            scratch_shapes=[
                pltpu.VMEM((nk, tk, F_out), op_dtype),   # fused `support` slabs
                pltpu.VMEM((tm, F_out), jnp.float32),    # f32 row accumulator
            ],
        ),
        compiler_params=pltpu.CompilerParams(
            # Row axis must be sequential: the support scratch written while
            # i == 0 is re-used by every later row block.  k is the reduction
            # axis (last in the grid).
            dimension_semantics=("arbitrary", "arbitrary"),
        ),
        cost_estimate=cost,
    )(x, weight, adj)


if __name__ == "__main__":
    # ---- primary test: module-consistent small shapes ------------------------
    N, in_size, out_size = 256, 256, 128
    key = jax.random.PRNGKey(0)
    kx, kadj, kw = jax.random.split(key, 3)

    x = jax.random.normal(kx, (N, in_size), dtype=jnp.float32)

    # Dense row-normalized adjacency standing in for the sparse adj.
    adj_raw = (jax.random.uniform(kadj, (N, N)) < 0.05).astype(jnp.float32)
    adj_raw = adj_raw + jnp.eye(N, dtype=jnp.float32)          # self-loops
    adj = adj_raw / jnp.sum(adj_raw, axis=1, keepdims=True)    # row-normalize

    # reset_parameters(): stdv = 1/sqrt(out_size); weight ~ U(-stdv, stdv)
    stdv = 1.0 / math.sqrt(out_size)
    weight = jax.random.uniform(
        kw, (in_size, out_size), dtype=jnp.float32, minval=-stdv, maxval=stdv
    )

    out = jax.block_until_ready(graph_convolution_forward(x, adj, weight))
    ref = adj @ (x @ weight)
    assert out.shape == (N, out_size)
    assert jnp.allclose(out, ref, atol=1e-4, rtol=1e-4), "f32 fused mismatch"

    # ---- non-128-aligned graph size (full-extent blocks, single grid step) ----
    N2, in2, out2 = 136, 72, 96
    k1, k2, k3 = jax.random.split(jax.random.PRNGKey(1), 3)
    x2 = jax.random.normal(k1, (N2, in2), dtype=jnp.float32)
    a2 = jax.random.uniform(k2, (N2, N2), dtype=jnp.float32)
    w2 = jax.random.uniform(k3, (in2, out2), dtype=jnp.float32, minval=-0.1, maxval=0.1)
    out2_arr = jax.block_until_ready(graph_convolution_forward(x2, a2, w2))
    ref2 = a2 @ (x2 @ w2)
    assert jnp.allclose(out2_arr, ref2, atol=1e-3, rtol=1e-3), "unaligned mismatch"

    # ---- row + contraction tiled path (support slabs + k accumulation) -------
    N3, in3, out3 = 512, 128, 128
    k4, k5, k6 = jax.random.split(jax.random.PRNGKey(2), 3)
    x3 = jax.random.normal(k4, (N3, in3), dtype=jnp.float32)
    a3 = jax.random.normal(k5, (N3, N3), dtype=jnp.float32) * 0.05
    w3 = jax.random.normal(k6, (in3, out3), dtype=jnp.float32) * 0.05
    out3_arr = jax.block_until_ready(
        graph_convolution_forward(x3, a3, w3, row_block=128, k_block=128)
    )
    ref3 = a3 @ (x3 @ w3)
    assert jnp.allclose(out3_arr, ref3, atol=1e-3, rtol=1e-3), "tiled mismatch"

    # ---- partial trailing row block (masked output store) --------------------
    N4, in4, out4 = 384, 96, 80
    k7, k8, k9 = jax.random.split(jax.random.PRNGKey(3), 3)
    x4 = jax.random.normal(k7, (N4, in4), dtype=jnp.float32)
    a4 = jax.random.normal(k8, (N4, N4), dtype=jnp.float32) * 0.05
    w4 = jax.random.normal(k9, (in4, out4), dtype=jnp.float32) * 0.05
    out4_arr = jax.block_until_ready(
        graph_convolution_forward(x4, a4, w4, row_block=256)
    )
    ref4 = a4 @ (x4 @ w4)
    assert jnp.allclose(out4_arr, ref4, atol=1e-3, rtol=1e-3), "partial-row mismatch"

    # ---- bf16 operands with f32 accumulation (looser tolerance) --------------
    out_bf16 = jax.block_until_ready(
        graph_convolution_forward(x, adj, weight, operand_dtype=jnp.bfloat16)
    )
    assert jnp.allclose(out_bf16, ref, atol=5e-2, rtol=5e-2), "bf16 mismatch"

    print("KERNEL_OK")
</pallas_src>

<mosaic_0001>
module attributes {stable_mosaic.version = 11 : i64} {
  func.func @_gcn_fused_kernel(%arg0: i32, %arg1: i32, %arg2: memref<256x256xf32, #tpu.memory_space<vmem>>, %arg3: memref<256x128xf32, #tpu.memory_space<vmem>>, %arg4: memref<256x256xf32, #tpu.memory_space<vmem>>, %arg5: memref<256x128xf32, #tpu.memory_space<vmem>>, %arg6: memref<1x256x128xf32, #tpu.memory_space<vmem>>, %arg7: memref<256x128xf32, #tpu.memory_space<vmem>>) attributes {dimension_semantics = [#tpu.dimension_semantics<arbitrary>, #tpu.dimension_semantics<arbitrary>], iteration_bounds = array<i64: 1, 1>, scalar_prefetch = 0 : i64, scratch_operands = 2 : i64, tpu.core_type = #tpu.core_type<tc>, window_params = [{pipeline_mode = #tpu.pipeline_mode<synchronous>, transform_indices = @transform_0, window_bounds = array<i64: 256, 256>}, {pipeline_mode = #tpu.pipeline_mode<synchronous>, transform_indices = @transform_1, window_bounds = array<i64: 256, 128>}, {transform_indices = @transform_2, window_bounds = array<i64: 256, 256>}, {transform_indices = @transform_3, window_bounds = array<i64: 256, 128>}]} {
    %c0_i32 = arith.constant 0 : i32
    %0 = arith.cmpi eq, %arg0, %c0_i32 : i32
    %1 = arith.extui %0 : i1 to i32
    %c0_i32_0 = arith.constant 0 : i32
    %2 = arith.cmpi ne, %1, %c0_i32_0 : i32
    scf.if %2 {
      %c0_10 = arith.constant 0 : index
      %c0_11 = arith.constant 0 : index
      %17 = vector.load %arg2[%c0_10, %c0_11] : memref<256x256xf32, #tpu.memory_space<vmem>>, vector<256x256xf32>
      %c0_12 = arith.constant 0 : index
      %c0_13 = arith.constant 0 : index
      %18 = vector.load %arg3[%c0_12, %c0_13] : memref<256x128xf32, #tpu.memory_space<vmem>>, vector<256x128xf32>
      %cst_14 = arith.constant dense<0.000000e+00> : vector<256x128xf32>
      %19 = tpu.matmul %17, %18, %cst_14 {dimension_numbers = #tpu.dot_dimension_numbers<[1], [0], [0], [1], [0, 0, 1, 1], [], []>} : vector<256x256xf32>, vector<256x128xf32>, vector<256x128xf32> -> vector<256x128xf32>
      %20 = arith.index_cast %arg1 : i32 to index
      %c0_15 = arith.constant 0 : index
      %c0_16 = arith.constant 0 : index
      %21 = vector.load %arg6[%20, %c0_15, %c0_16] : memref<1x256x128xf32, #tpu.memory_space<vmem>>, vector<1x256x128xf32>
      %22 = vector.shape_cast %21 : vector<1x256x128xf32> to vector<256x128xf32>
      %23 = vector.shape_cast %19 : vector<256x128xf32> to vector<1x256x128xf32>
      tpu.vector_store %arg6[%20, %c0_15, %c0_16], %23 {strides = array<i32>} : memref<1x256x128xf32, #tpu.memory_space<vmem>>, vector<1x256x128xf32>,
    } else {
    }
    %c0 = arith.constant 0 : index
    %c0_1 = arith.constant 0 : index
    %3 = vector.load %arg4[%c0, %c0_1] : memref<256x256xf32, #tpu.memory_space<vmem>>, vector<256x256xf32>
    %4 = arith.index_cast %arg1 : i32 to index
    %c0_2 = arith.constant 0 : index
    %c0_3 = arith.constant 0 : index
    %5 = vector.load %arg6[%4, %c0_2, %c0_3] : memref<1x256x128xf32, #tpu.memory_space<vmem>>, vector<1x256x128xf32>
    %6 = vector.shape_cast %5 : vector<1x256x128xf32> to vector<256x128xf32>
    %cst = arith.constant dense<0.000000e+00> : vector<256x128xf32>
    %7 = tpu.matmul %3, %6, %cst {dimension_numbers = #tpu.dot_dimension_numbers<[1], [0], [0], [1], [0, 0, 1, 1], [], []>} : vector<256x256xf32>, vector<256x128xf32>, vector<256x128xf32> -> vector<256x128xf32>
    %c0_i32_4 = arith.constant 0 : i32
    %8 = arith.cmpi eq, %arg1, %c0_i32_4 : i32
    %9 = arith.extui %8 : i1 to i32
    %c0_i32_5 = arith.constant 0 : i32
    %10 = arith.cmpi ne, %9, %c0_i32_5 : i32
    scf.if %10 {
      %c0_10 = arith.constant 0 : index
      %c0_11 = arith.constant 0 : index
      %17 = vector.load %arg7[%c0_10, %c0_11] : memref<256x128xf32, #tpu.memory_space<vmem>>, vector<256x128xf32>
      tpu.vector_store %arg7[%c0_10, %c0_11], %7 {strides = array<i32>} : memref<256x128xf32, #tpu.memory_space<vmem>>, vector<256x128xf32>,
    } else {
    }
    %c0_i32_6 = arith.constant 0 : i32
    %11 = arith.cmpi sgt, %arg1, %c0_i32_6 : i32
    %12 = arith.extui %11 : i1 to i32
    %c0_i32_7 = arith.constant 0 : i32
    %13 = arith.cmpi ne, %12, %c0_i32_7 : i32
    scf.if %13 {
      %c0_10 = arith.constant 0 : index
      %c0_11 = arith.constant 0 : index
      %17 = vector.load %arg7[%c0_10, %c0_11] : memref<256x128xf32, #tpu.memory_space<vmem>>, vector<256x128xf32>
      %18 = arith.addf %17, %7 : vector<256x128xf32>
      %c0_12 = arith.constant 0 : index
      %c0_13 = arith.constant 0 : index
      %19 = vector.load %arg7[%c0_12, %c0_13] : memref<256x128xf32, #tpu.memory_space<vmem>>, vector<256x128xf32>
      tpu.vector_store %arg7[%c0_12, %c0_13], %18 {strides = array<i32>} : memref<256x128xf32, #tpu.memory_space<vmem>>, vector<256x128xf32>,
    } else {
    }
    %c0_i32_8 = arith.constant 0 : i32
    %14 = arith.cmpi eq, %arg1, %c0_i32_8 : i32
    %15 = arith.extui %14 : i1 to i32
    %c0_i32_9 = arith.constant 0 : i32
    %16 = arith.cmpi ne, %15, %c0_i32_9 : i32
    scf.if %16 {
      %c0_10 = arith.constant 0 : index
      %c0_11 = arith.constant 0 : index
      %17 = vector.load %arg7[%c0_10, %c0_11] : memref<256x128xf32, #tpu.memory_space<vmem>>, vector<256x128xf32>
      %c0_12 = arith.constant 0 : index
      %c0_13 = arith.constant 0 : index
      %18 = vector.load %arg5[%c0_12, %c0_13] : memref<256x128xf32, #tpu.memory_space<vmem>>, vector<256x128xf32>
      tpu.vector_store %arg5[%c0_12, %c0_13], %17 {strides = array<i32>} : memref<256x128xf32, #tpu.memory_space<vmem>>, vector<256x128xf32>,
    } else {
    }
    return
  }
  func.func @transform_0(%arg0: i32, %arg1: i32) -> (i32, i32) {
    %c0_i32 = arith.constant 0 : i32
    %c0_i32_0 = arith.constant 0 : i32
    %c0_i32_1 = arith.constant 0 : i32
    return %c0_i32, %c0_i32_0 : i32, i32
  }
  func.func @transform_1(%arg0: i32, %arg1: i32) -> (i32, i32) {
    %c0_i32 = arith.constant 0 : i32
    %c0_i32_0 = arith.constant 0 : i32
    %c0_i32_1 = arith.constant 0 : i32
    return %c0_i32, %c0_i32_0 : i32, i32
  }
  func.func @transform_2(%arg0: i32, %arg1: i32) -> (i32, i32) {
    %c0_i32 = arith.constant 0 : i32
    return %arg0, %arg1 : i32, i32
  }
  func.func @transform_3(%arg0: i32, %arg1: i32) -> (i32, i32) {
    %c0_i32 = arith.constant 0 : i32
    %c0_i32_0 = arith.constant 0 : i32
    return %arg0, %c0_i32 : i32, i32
  }
}

</mosaic_0001>

<llo_original>
// kernel: tpu_custom_call.1
$region0: #{tpu_custom_call.1}
  #allocation0 [shape = 'u32[]', space=smem, size = 0x4, offset = 0x4, fixed_abs, tag = 'smem constant byte address 0x4 - core index']
  #allocation1 [shape = 'u32[72,128]{1,0:T(1,128)}', space=vmem, size = 0x9000, scoped, tag = 'internal scratch']
  #allocation2 [shape = 'f32[1,256,128]{2,1,0:T(8,128)}', space=vmem, size = 0x20000, scoped, tag = 'scratch operand']
  #allocation3 [shape = 'f32[256,128]{1,0:T(8,128)}', space=vmem, size = 0x20000, scoped, tag = 'scratch operand']
  %s0 = inlined_call_operand.hbm [shape: f32[256,256], index: 0, kind: input, shape index: {}]
  %s1 = inlined_call_operand.hbm [shape: f32[256,128], index: 1, kind: input, shape index: {}]
  %s2 = inlined_call_operand.hbm [shape: f32[256,256], index: 2, kind: input, shape index: {}]
  %s3 = inlined_call_operand.hbm [shape: f32[256,128], index: 3, kind: output, shape index: {}]
  %s4 = sld [smem:[#allocation0]]
  $region50: #{tpu_custom_call.1} parent=0
    _
  %s6 = ssub.s32 1, %s4
  %s7 = scalar_select 0, %s6, %s4
  $region1: #{tpu_custom_call.1} parent=0
    #allocation4 [shape = 'u8[262144]{0}', space=vmem, size = 0x40000, scoped, tag = 'input window, operand 0, single buffered']
    #allocation5 [shape = 's32[1]{0}', space=sflag, size = 0x4, scoped, tag = 'scoped memory for tpu_custom_call.1']
    #allocation6 [shape = 's32[1]{0}', space=sflag, size = 0x4, scoped, tag = 'scoped memory for tpu_custom_call.1']
    #allocation7 [shape = 'u8[131072]{0}', space=vmem, size = 0x20000, scoped, tag = 'input window, operand 1, single buffered']
    #allocation8 [shape = 's32[1]{0}', space=sflag, size = 0x4, scoped, tag = 'scoped memory for tpu_custom_call.1']
    #allocation9 [shape = 'u8[262144]{0}', space=vmem, size = 0x40000, scoped, tag = 'input window, operand 2, single buffered']
    #allocation10 [shape = 'u8[131072]{0}', space=vmem, size = 0x20000, scoped, tag = 'output window, operand 0, single buffered']
    %8 = vsyncpa [#allocation5], 0
    %9 = vsyncpa [#allocation8], 0
    %10 = vsyncpa [#allocation6], 0
    // Predicated region
    $region2: #{tpu_custom_call.1} parent=1 // pred_check
      _
    $region3: #{tpu_custom_call.1} parent=1 // pred_check_branch
      %12 = sbr.rel (0) target = $region5
    $region4: #{tpu_custom_call.1} parent=1 // pred_region
      %14 = vsyncadd [#allocation5], 0
      %s15 = sshll.u32 %s0, 4
      %s16 = int_to_ptr.hbm [resolvable:$true] %s15
      %s17 = sshll.u32 [#allocation4], 4
      %s18 = int_to_ptr.vmem [resolvable:$true] %s17
      %23 = dma.hbm_to_vmem [thread:$0]  %s16, 8192, %s18, [#allocation5], 256, 256, 16
    $region5: #{tpu_custom_call.1} parent=1 // pred_fallthru
      _
    // Predicated region
    $region6: #{tpu_custom_call.1} parent=1 // pred_check
      _
    $region7: #{tpu_custom_call.1} parent=1 // pred_check_branch
      %25 = sbr.rel (0) target = $region9
    $region8: #{tpu_custom_call.1} parent=1 // pred_region
      %27 = vsyncadd [#allocation8], 0
      %s28 = sshll.u32 %s1, 4
      %s29 = int_to_ptr.hbm [resolvable:$true] %s28
      %s30 = sshll.u32 [#allocation7], 4
      %s31 = int_to_ptr.vmem [resolvable:$true] %s30
      %36 = dma.hbm_to_vmem [thread:$0]  %s29, 4096, %s31, [#allocation8], 128, 128, 8
    $region9: #{tpu_custom_call.1} parent=1 // pred_fallthru
      _
    // Predicated region
    $region10: #{tpu_custom_call.1} parent=1 // pred_check
      _
    $region11: #{tpu_custom_call.1} parent=1 // pred_check_branch
      %38 = sbr.rel (0) target = $region13
    $region12: #{tpu_custom_call.1} parent=1 // pred_region
      %40 = vsyncadd [#allocation8], 0
      %s41 = sshll.u32 %s2, 4
      %s42 = int_to_ptr.hbm [resolvable:$true] %s41
      %s43 = sshll.u32 [#allocation9], 4
      %s44 = int_to_ptr.vmem [resolvable:$true] %s43
      %49 = dma.hbm_to_vmem [thread:$0]  %s42, 8192, %s44, [#allocation8], 256, 256, 16
    $region13: #{tpu_custom_call.1} parent=1 // pred_fallthru
      _
    // Predicated region
    $region14: #{tpu_custom_call.1} parent=1 // pred_check
      _
    $region15: #{tpu_custom_call.1} parent=1 // pred_check_branch
      %51 = sbr.rel (0) target = $region17
    $region16: #{tpu_custom_call.1} parent=1 // pred_region
      %53 = dma.done [#allocation5], 8192
    $region17: #{tpu_custom_call.1} parent=1 // pred_fallthru
      _
    // Predicated region
    $region18: #{tpu_custom_call.1} parent=1 // pred_check
      _
    $region19: #{tpu_custom_call.1} parent=1 // pred_check_branch
      %55 = sbr.rel (0) target = $region21
    $region20: #{tpu_custom_call.1} parent=1 // pred_region
      %57 = dma.done [#allocation8], 4096
    $region21: #{tpu_custom_call.1} parent=1 // pred_fallthru
      _
    // Predicated region
    $region22: #{tpu_custom_call.1} parent=1 // pred_check
      _
    $region23: #{tpu_custom_call.1} parent=1 // pred_check_branch
      %59 = sbr.rel (0) target = $region25
    $region24: #{tpu_custom_call.1} parent=1 // pred_region
      %61 = dma.done [#allocation8], 8192
    $region25: #{tpu_custom_call.1} parent=1 // pred_fallthru
      _
    %p62 = scmp.eq.s32.totalorder 0, 0
    // Predicated region
    $region26: #{tpu_custom_call.1} parent=1 // pred_check
      %p63 = pneg %p62
    $region27: #{tpu_custom_call.1} parent=1 // pred_check_branch
      %65 = sbr.rel (%p63) target = $region29
    $region28: #{tpu_custom_call.1} parent=1 // pred_region
      %v66 = vld [vmem:[#allocation4] sm:$0xff]
      %v67 = vld [vmem:[#allocation4 + $0x8] sm:$0xff]
      %v68 = vld [vmem:[#allocation4 + $0x10] sm:$0xff]
      %v69 = vld [vmem:[#allocation4 + $0x18] sm:$0xff]
      %v70 = vld [vmem:[#allocation4 + $0x20] sm:$0xff]
      %v71 = vld [vmem:[#allocation4 + $0x28] sm:$0xff]
      %v72 = vld [vmem:[#allocation4 + $0x30] sm:$0xff]
      %v73 = vld [vmem:[#allocation4 + $0x38] sm:$0xff]
      %v74 = vld [vmem:[#allocation4 + $0x40] sm:$0xff]
      %v75 = vld [vmem:[#allocation4 + $0x48] sm:$0xff]
      %v76 = vld [vmem:[#allocation4 + $0x50] sm:$0xff]
      %v77 = vld [vmem:[#allocation4 + $0x58] sm:$0xff]
      %v78 = vld [vmem:[#allocation4 + $0x60] sm:$0xff]
      %v79 = vld [vmem:[#allocation4 + $0x68] sm:$0xff]
      %v80 = vld [vmem:[#allocation4 + $0x70] sm:$0xff]
      %v81 = vld [vmem:[#allocation4 + $0x78] sm:$0xff]
      %v82 = vld [vmem:[#allocation4 + $0x80] sm:$0xff]
      %v83 = vld [vmem:[#allocation4 + $0x88] sm:$0xff]
      %v84 = vld [vmem:[#allocation4 + $0x90] sm:$0xff]
      %v85 = vld [vmem:[#allocation4 + $0x98] sm:$0xff]
      %v86 = vld [vmem:[#allocation4 + $0xa0] sm:$0xff]
      %v87 = vld [vmem:[#allocation4 + $0xa8] sm:$0xff]
      %v88 = vld [vmem:[#allocation4 + $0xb0] sm:$0xff]
      %v89 = vld [vmem:[#allocation4 + $0xb8] sm:$0xff]
      %v90 = vld [vmem:[#allocation4 + $0xc0] sm:$0xff]
      %v91 = vld [vmem:[#allocation4 + $0xc8] sm:$0xff]
      %v92 = vld [vmem:[#allocation4 + $0xd0] sm:$0xff]
      %v93 = vld [vmem:[#allocation4 + $0xd8] sm:$0xff]
      %v94 = vld [vmem:[#allocation4 + $0xe0] sm:$0xff]
      %v95 = vld [vmem:[#allocation4 + $0xe8] sm:$0xff]
      %v96 = vld [vmem:[#allocation4 + $0xf0] sm:$0xff]
      %v97 = vld [vmem:[#allocation4 + $0xf8] sm:$0xff]
      %v98 = vld [vmem:[#allocation4 + $0x100] sm:$0xff]
      %v99 = vld [vmem:[#allocation4 + $0x108] sm:$0xff]
      %v100 = vld [vmem:[#allocation4 + $0x110] sm:$0xff]
      %v101 = vld [vmem:[#allocation4 + $0x118] sm:$0xff]
      %v102 = vld [vmem:[#allocation4 + $0x120] sm:$0xff]
      %v103 = vld [vmem:[#allocation4 + $0x128] sm:$0xff]
      %v104 = vld [vmem:[#allocation4 + $0x130] sm:$0xff]
      %v105 = vld [vmem:[#allocation4 + $0x138] sm:$0xff]
      %v106 = vld [vmem:[#allocation4 + $0x140] sm:$0xff]
      %v107 = vld [vmem:[#allocation4 + $0x148] sm:$0xff]
      %v108 = vld [vmem:[#allocation4 + $0x150] sm:$0xff]
      %v109 = vld [vmem:[#allocation4 + $0x158] sm:$0xff]
      %v110 = vld [vmem:[#allocation4 + $0x160] sm:$0xff]
      %v111 = vld [vmem:[#allocation4 + $0x168] sm:$0xff]
      %v112 = vld [vmem:[#allocation4 + $0x170] sm:$0xff]
      %v113 = vld [vmem:[#allocation4 + $0x178] sm:$0xff]
      %v114 = vld [vmem:[#allocation4 + $0x180] sm:$0xff]
      %v115 = vld [vmem:[#allocation4 + $0x188] sm:$0xff]
      %v116 = vld [vmem:[#allocation4 + $0x190] sm:$0xff]
      %v117 = vld [vmem:[#allocation4 + $0x198] sm:$0xff]
      %v118 = vld [vmem:[#allocation4 + $0x1a0] sm:$0xff]
      %v119 = vld [vmem:[#allocation4 + $0x1a8] sm:$0xff]
      %v120 = vld [vmem:[#allocation4 + $0x1b0] sm:$0xff]
      %v121 = vld [vmem:[#allocation4 + $0x1b8] sm:$0xff]
      %v122 = vld [vmem:[#allocation4 + $0x1c0] sm:$0xff]
      %v123 = vld [vmem:[#allocation4 + $0x1c8] sm:$0xff]
      %v124 = vld [vmem:[#allocation4 + $0x1d0] sm:$0xff]
      %v125 = vld [vmem:[#allocation4 + $0x1d8] sm:$0xff]
      %v126 = vld [vmem:[#allocation4 + $0x1e0] sm:$0xff]
      %v127 = vld [vmem:[#allocation4 + $0x1e8] sm:$0xff]
      %v128 = vld [vmem:[#allocation4 + $0x1f0] sm:$0xff]
      %v129 = vld [vmem:[#allocation4 + $0x1f8] sm:$0xff]
      %v130 = vld [vmem:[#allocation7] sm:$0xff]
      %v131 = vld [vmem:[#allocation7 + $0x8] sm:$0xff]
      %v132 = vld [vmem:[#allocation7 + $0x10] sm:$0xff]
      %v133 = vld [vmem:[#allocation7 + $0x18] sm:$0xff]
      %v134 = vld [vmem:[#allocation7 + $0x20] sm:$0xff]
      %v135 = vld [vmem:[#allocation7 + $0x28] sm:$0xff]
      %v136 = vld [vmem:[#allocation7 + $0x30] sm:$0xff]
      %v137 = vld [vmem:[#allocation7 + $0x38] sm:$0xff]
      %v138 = vld [vmem:[#allocation7 + $0x40] sm:$0xff]
      %v139 = vld [vmem:[#allocation7 + $0x48] sm:$0xff]
      %v140 = vld [vmem:[#allocation7 + $0x50] sm:$0xff]
      %v141 = vld [vmem:[#allocation7 + $0x58] sm:$0xff]
      %v142 = vld [vmem:[#allocation7 + $0x60] sm:$0xff]
      %v143 = vld [vmem:[#allocation7 + $0x68] sm:$0xff]
      %v144 = vld [vmem:[#allocation7 + $0x70] sm:$0xff]
      %v145 = vld [vmem:[#allocation7 + $0x78] sm:$0xff]
      %v146 = vld [vmem:[#allocation7 + $0x80] sm:$0xff]
      %v147 = vld [vmem:[#allocation7 + $0x88] sm:$0xff]
      %v148 = vld [vmem:[#allocation7 + $0x90] sm:$0xff]
      %v149 = vld [vmem:[#allocation7 + $0x98] sm:$0xff]
      %v150 = vld [vmem:[#allocation7 + $0xa0] sm:$0xff]
      %v151 = vld [vmem:[#allocation7 + $0xa8] sm:$0xff]
      %v152 = vld [vmem:[#allocation7 + $0xb0] sm:$0xff]
      %v153 = vld [vmem:[#allocation7 + $0xb8] sm:$0xff]
      %v154 = vld [vmem:[#allocation7 + $0xc0] sm:$0xff]
      %v155 = vld [vmem:[#allocation7 + $0xc8] sm:$0xff]
      %v156 = vld [vmem:[#allocation7 + $0xd0] sm:$0xff]
      %v157 = vld [vmem:[#allocation7 + $0xd8] sm:$0xff]
      %v158 = vld [vmem:[#allocation7 + $0xe0] sm:$0xff]
      %v159 = vld [vmem:[#allocation7 + $0xe8] sm:$0xff]
      %v160 = vld [vmem:[#allocation7 + $0xf0] sm:$0xff]
      %v161 = vld [vmem:[#allocation7 + $0xf8] sm:$0xff]
      %162 = vmatpush.msra.mxu0 %v145
      %163 = vmatpush.msra.mxu0 %v144
      %164 = vmatpush.msra.mxu0 %v143
      %165 = vmatpush.msra.mxu0 %v142
      %166 = vmatpush.msra.mxu0 %v141
      %167 = vmatpush.msra.mxu0 %v140
      %168 = vmatpush.msra.mxu0 %v139
      %169 = vmatpush.msra.mxu0 %v138
      %170 = vmatpush.msra.mxu0 %v137
      %171 = vmatpush.msra.mxu0 %v136
      %172 = vmatpush.msra.mxu0 %v135
      %173 = vmatpush.msra.mxu0 %v134
      %174 = vmatpush.msra.mxu0 %v133
      %175 = vmatpush.msra.mxu0 %v132
      %176 = vmatpush.msra.mxu0 %v131
      %177 = vmatpush.msra.mxu0 %v130
      %178 = vmatmul.f32.gmra.mxu0 %v66
      %v179 = vpop.f32.mrf.mxu0
      %v180 = vadd.f32 0.0, %v179
      %181 = vmatmul.f32.gmra.mxu0 %v68
      %v182 = vpop.f32.mrf.mxu0
      %v183 = vadd.f32 0.0, %v182
      %184 = vmatmul.f32.gmra.mxu0 %v70
      %v185 = vpop.f32.mrf.mxu0
      %v186 = vadd.f32 0.0, %v185
      %187 = vmatmul.f32.gmra.mxu0 %v72
      %v188 = vpop.f32.mrf.mxu0
      %v189 = vadd.f32 0.0, %v188
      %190 = vmatmul.f32.gmra.mxu0 %v74
      %v191 = vpop.f32.mrf.mxu0
      %v192 = vadd.f32 0.0, %v191
      %193 = vmatmul.f32.gmra.mxu0 %v76
      %v194 = vpop.f32.mrf.mxu0
      %v195 = vadd.f32 0.0, %v194
      %196 = vmatmul.f32.gmra.mxu0 %v78
      %v197 = vpop.f32.mrf.mxu0
      %v198 = vadd.f32 0.0, %v197
      %199 = vmatmul.f32.gmra.mxu0 %v80
      %v200 = vpop.f32.mrf.mxu0
      %v201 = vadd.f32 0.0, %v200
      %202 = vmatmul.f32.gmra.mxu0 %v82
      %v203 = vpop.f32.mrf.mxu0
      %v204 = vadd.f32 0.0, %v203
      %205 = vmatmul.f32.gmra.mxu0 %v84
      %v206 = vpop.f32.mrf.mxu0
      %v207 = vadd.f32 0.0, %v206
      %208 = vmatmul.f32.gmra.mxu0 %v86
      %v209 = vpop.f32.mrf.mxu0
      %v210 = vadd.f32 0.0, %v209
      %211 = vmatmul.f32.gmra.mxu0 %v88
      %v212 = vpop.f32.mrf.mxu0
      %v213 = vadd.f32 0.0, %v212
      %214 = vmatmul.f32.gmra.mxu0 %v90
      %v215 = vpop.f32.mrf.mxu0
      %v216 = vadd.f32 0.0, %v215
      %217 = vmatmul.f32.gmra.mxu0 %v92
      %v218 = vpop.f32.mrf.mxu0
      %v219 = vadd.f32 0.0, %v218
      %220 = vmatmul.f32.gmra.mxu0 %v94
      %v221 = vpop.f32.mrf.mxu0
      %v222 = vadd.f32 0.0, %v221
      %223 = vmatmul.f32.gmra.mxu0 %v96
      %v224 = vpop.f32.mrf.mxu0
      %v225 = vadd.f32 0.0, %v224
      %226 = vmatmul.f32.gmra.mxu0 %v98
      %v227 = vpop.f32.mrf.mxu0
      %v228 = vadd.f32 0.0, %v227
      %229 = vmatmul.f32.gmra.mxu0 %v100
      %v230 = vpop.f32.mrf.mxu0
      %v231 = vadd.f32 0.0, %v230
      %232 = vmatmul.f32.gmra.mxu0 %v102
      %v233 = vpop.f32.mrf.mxu0
      %v234 = vadd.f32 0.0, %v233
      %235 = vmatmul.f32.gmra.mxu0 %v104
      %v236 = vpop.f32.mrf.mxu0
      %v237 = vadd.f32 0.0, %v236
      %238 = vmatmul.f32.gmra.mxu0 %v106
      %v239 = vpop.f32.mrf.mxu0
      %v240 = vadd.f32 0.0, %v239
      %241 = vmatmul.f32.gmra.mxu0 %v108
      %v242 = vpop.f32.mrf.mxu0
      %v243 = vadd.f32 0.0, %v242
      %244 = vmatmul.f32.gmra.mxu0 %v110
      %v245 = vpop.f32.mrf.mxu0
      %v246 = vadd.f32 0.0, %v245
      %247 = vmatmul.f32.gmra.mxu0 %v112
      %v248 = vpop.f32.mrf.mxu0
      %v249 = vadd.f32 0.0, %v248
      %250 = vmatmul.f32.gmra.mxu0 %v114
      %v251 = vpop.f32.mrf.mxu0
      %v252 = vadd.f32 0.0, %v251
      %253 = vmatmul.f32.gmra.mxu0 %v116
      %v254 = vpop.f32.mrf.mxu0
      %v255 = vadd.f32 0.0, %v254
      %256 = vmatmul.f32.gmra.mxu0 %v118
      %v257 = vpop.f32.mrf.mxu0
      %v258 = vadd.f32 0.0, %v257
      %259 = vmatmul.f32.gmra.mxu0 %v120
      %v260 = vpop.f32.mrf.mxu0
      %v261 = vadd.f32 0.0, %v260
      %262 = vmatmul.f32.gmra.mxu0 %v122
      %v263 = vpop.f32.mrf.mxu0
      %v264 = vadd.f32 0.0, %v263
      %265 = vmatmul.f32.gmra.mxu0 %v124
      %v266 = vpop.f32.mrf.mxu0
      %v267 = vadd.f32 0.0, %v266
      %268 = vmatmul.f32.gmra.mxu0 %v126
      %v269 = vpop.f32.mrf.mxu0
      %v270 = vadd.f32 0.0, %v269
      %271 = vmatmul.f32.gmra.mxu0 %v128
      %v272 = vpop.f32.mrf.mxu0
      %v273 = vadd.f32 0.0, %v272
      %274 = vdwg.mxu0
      %275 = vmatpush.msra.mxu0 %v161
      %276 = vmatpush.msra.mxu0 %v160
      %277 = vmatpush.msra.mxu0 %v159
      %278 = vmatpush.msra.mxu0 %v158
      %279 = vmatpush.msra.mxu0 %v157
      %280 = vmatpush.msra.mxu0 %v156
      %281 = vmatpush.msra.mxu0 %v155
      %282 = vmatpush.msra.mxu0 %v154
      %283 = vmatpush.msra.mxu0 %v153
      %284 = vmatpush.msra.mxu0 %v152
      %285 = vmatpush.msra.mxu0 %v151
      %286 = vmatpush.msra.mxu0 %v150
      %287 = vmatpush.msra.mxu0 %v149
      %288 = vmatpush.msra.mxu0 %v148
      %289 = vmatpush.msra.mxu0 %v147
      %290 = vmatpush.msra.mxu0 %v146
      %291 = vmatmul.f32.gmra.mxu0 %v67
      %v292 = vpop.f32.mrf.mxu0
      %v293 = vadd.f32 %v180, %v292
      %294 = vmatmul.f32.gmra.mxu0 %v69
      %v295 = vpop.f32.mrf.mxu0
      %v296 = vadd.f32 %v183, %v295
      %297 = vmatmul.f32.gmra.mxu0 %v71
      %v298 = vpop.f32.mrf.mxu0
      %v299 = vadd.f32 %v186, %v298
      %300 = vmatmul.f32.gmra.mxu0 %v73
      %v301 = vpop.f32.mrf.mxu0
      %v302 = vadd.f32 %v189, %v301
      %303 = vmatmul.f32.gmra.mxu0 %v75
      %v304 = vpop.f32.mrf.mxu0
      %v305 = vadd.f32 %v192, %v304
      %306 = vmatmul.f32.gmra.mxu0 %v77
      %v307 = vpop.f32.mrf.mxu0
      %v308 = vadd.f32 %v195, %v307
      %309 = vmatmul.f32.gmra.mxu0 %v79
      %v310 = vpop.f32.mrf.mxu0
      %v311 = vadd.f32 %v198, %v310
      %312 = vmatmul.f32.gmra.mxu0 %v81
      %v313 = vpop.f32.mrf.mxu0
      %v314 = vadd.f32 %v201, %v313
      %315 = vmatmul.f32.gmra.mxu0 %v83
      %v316 = vpop.f32.mrf.mxu0
      %v317 = vadd.f32 %v204, %v316
      %318 = vmatmul.f32.gmra.mxu0 %v85
      %v319 = vpop.f32.mrf.mxu0
      %v320 = vadd.f32 %v207, %v319
      %321 = vmatmul.f32.gmra.mxu0 %v87
      %v322 = vpop.f32.mrf.mxu0
      %v323 = vadd.f32 %v210, %v322
      %324 = vmatmul.f32.gmra.mxu0 %v89
      %v325 = vpop.f32.mrf.mxu0
      %v326 = vadd.f32 %v213, %v325
      %327 = vmatmul.f32.gmra.mxu0 %v91
      %v328 = vpop.f32.mrf.mxu0
      %v329 = vadd.f32 %v216, %v328
      %330 = vmatmul.f32.gmra.mxu0 %v93
      %v331 = vpop.f32.mrf.mxu0
      %v332 = vadd.f32 %v219, %v331
      %333 = vmatmul.f32.gmra.mxu0 %v95
      %v334 = vpop.f32.mrf.mxu0
      %v335 = vadd.f32 %v222, %v334
      %336 = vmatmul.f32.gmra.mxu0 %v97
      %v337 = vpop.f32.mrf.mxu0
      %v338 = vadd.f32 %v225, %v337
      %339 = vmatmul.f32.gmra.mxu0 %v99
      %v340 = vpop.f32.mrf.mxu0
      %v341 = vadd.f32 %v228, %v340
      %342 = vmatmul.f32.gmra.mxu0 %v101
      %v343 = vpop.f32.mrf.mxu0
      %v344 = vadd.f32 %v231, %v343
      %345 = vmatmul.f32.gmra.mxu0 %v103
      %v346 = vpop.f32.mrf.mxu0
      %v347 = vadd.f32 %v234, %v346
      %348 = vmatmul.f32.gmra.mxu0 %v105
      %v349 = vpop.f32.mrf.mxu0
      %v350 = vadd.f32 %v237, %v349
      %351 = vmatmul.f32.gmra.mxu0 %v107
      %v352 = vpop.f32.mrf.mxu0
      %v353 = vadd.f32 %v240, %v352
      %354 = vmatmul.f32.gmra.mxu0 %v109
      %v355 = vpop.f32.mrf.mxu0
      %v356 = vadd.f32 %v243, %v355
      %357 = vmatmul.f32.gmra.mxu0 %v111
      %v358 = vpop.f32.mrf.mxu0
      %v359 = vadd.f32 %v246, %v358
      %360 = vmatmul.f32.gmra.mxu0 %v113
      %v361 = vpop.f32.mrf.mxu0
      %v362 = vadd.f32 %v249, %v361
      %363 = vmatmul.f32.gmra.mxu0 %v115
      %v364 = vpop.f32.mrf.mxu0
      %v365 = vadd.f32 %v252, %v364
      %366 = vmatmul.f32.gmra.mxu0 %v117
      %v367 = vpop.f32.mrf.mxu0
      %v368 = vadd.f32 %v255, %v367
      %369 = vmatmul.f32.gmra.mxu0 %v119
      %v370 = vpop.f32.mrf.mxu0
      %v371 = vadd.f32 %v258, %v370
      %372 = vmatmul.f32.gmra.mxu0 %v121
      %v373 = vpop.f32.mrf.mxu0
      %v374 = vadd.f32 %v261, %v373
      %375 = vmatmul.f32.gmra.mxu0 %v123
      %v376 = vpop.f32.mrf.mxu0
      %v377 = vadd.f32 %v264, %v376
      %378 = vmatmul.f32.gmra.mxu0 %v125
      %v379 = vpop.f32.mrf.mxu0
      %v380 = vadd.f32 %v267, %v379
      %381 = vmatmul.f32.gmra.mxu0 %v127
      %v382 = vpop.f32.mrf.mxu0
      %v383 = vadd.f32 %v270, %v382
      %384 = vmatmul.f32.gmra.mxu0 %v129
      %v385 = vpop.f32.mrf.mxu0
      %v386 = vadd.f32 %v273, %v385
      %387 = vdwg.mxu0
      %s388 = smul.u32 0, 256
      %s389 = scalar_lea.vmem [#allocation2], %s388
      %390 = vst [vmem:[%s389] sm:$0xff] %v293
      %391 = vst [vmem:[%s389 + $0x8] sm:$0xff] %v296
      %392 = vst [vmem:[%s389 + $0x10] sm:$0xff] %v299
      %393 = vst [vmem:[%s389 + $0x18] sm:$0xff] %v302
      %394 = vst [vmem:[%s389 + $0x20] sm:$0xff] %v305
      %395 = vst [vmem:[%s389 + $0x28] sm:$0xff] %v308
      %396 = vst [vmem:[%s389 + $0x30] sm:$0xff] %v311
      %397 = vst [vmem:[%s389 + $0x38] sm:$0xff] %v314
      %398 = vst [vmem:[%s389 + $0x40] sm:$0xff] %v317
      %399 = vst [vmem:[%s389 + $0x48] sm:$0xff] %v320
      %400 = vst [vmem:[%s389 + $0x50] sm:$0xff] %v323
      %401 = vst [vmem:[%s389 + $0x58] sm:$0xff] %v326
      %402 = vst [vmem:[%s389 + $0x60] sm:$0xff] %v329
      %403 = vst [vmem:[%s389 + $0x68] sm:$0xff] %v332
      %404 = vst [vmem:[%s389 + $0x70] sm:$0xff] %v335
      %405 = vst [vmem:[%s389 + $0x78] sm:$0xff] %v338
      %406 = vst [vmem:[%s389 + $0x80] sm:$0xff] %v341
      %407 = vst [vmem:[%s389 + $0x88] sm:$0xff] %v344
      %408 = vst [vmem:[%s389 + $0x90] sm:$0xff] %v347
      %409 = vst [vmem:[%s389 + $0x98] sm:$0xff] %v350
      %410 = vst [vmem:[%s389 + $0xa0] sm:$0xff] %v353
      %411 = vst [vmem:[%s389 + $0xa8] sm:$0xff] %v356
      %412 = vst [vmem:[%s389 + $0xb0] sm:$0xff] %v359
      %413 = vst [vmem:[%s389 + $0xb8] sm:$0xff] %v362
      %414 = vst [vmem:[%s389 + $0xc0] sm:$0xff] %v365
      %415 = vst [vmem:[%s389 + $0xc8] sm:$0xff] %v368
      %416 = vst [vmem:[%s389 + $0xd0] sm:$0xff] %v371
      %417 = vst [vmem:[%s389 + $0xd8] sm:$0xff] %v374
      %418 = vst [vmem:[%s389 + $0xe0] sm:$0xff] %v377
      %419 = vst [vmem:[%s389 + $0xe8] sm:$0xff] %v380
      %420 = vst [vmem:[%s389 + $0xf0] sm:$0xff] %v383
      %421 = vst [vmem:[%s389 + $0xf8] sm:$0xff] %v386
    $region29: #{tpu_custom_call.1} parent=1 // pred_fallthru
      _
    %v422 = vld [vmem:[#allocation9] sm:$0xff]
    %v423 = vld [vmem:[#allocation9 + $0x8] sm:$0xff]
    %v424 = vld [vmem:[#allocation9 + $0x10] sm:$0xff]
    %v425 = vld [vmem:[#allocation9 + $0x18] sm:$0xff]
    %v426 = vld [vmem:[#allocation9 + $0x20] sm:$0xff]
    %v427 = vld [vmem:[#allocation9 + $0x28] sm:$0xff]
    %v428 = vld [vmem:[#allocation9 + $0x30] sm:$0xff]
    %v429 = vld [vmem:[#allocation9 + $0x38] sm:$0xff]
    %v430 = vld [vmem:[#allocation9 + $0x40] sm:$0xff]
    %v431 = vld [vmem:[#allocation9 + $0x48] sm:$0xff]
    %v432 = vld [vmem:[#allocation9 + $0x50] sm:$0xff]
    %v433 = vld [vmem:[#allocation9 + $0x58] sm:$0xff]
    %v434 = vld [vmem:[#allocation9 + $0x60] sm:$0xff]
    %v435 = vld [vmem:[#allocation9 + $0x68] sm:$0xff]
    %v436 = vld [vmem:[#allocation9 + $0x70] sm:$0xff]
    %v437 = vld [vmem:[#allocation9 + $0x78] sm:$0xff]
    %v438 = vld [vmem:[#allocation9 + $0x80] sm:$0xff]
    %v439 = vld [vmem:[#allocation9 + $0x88] sm:$0xff]
    %v440 = vld [vmem:[#allocation9 + $0x90] sm:$0xff]
    %v441 = vld [vmem:[#allocation9 + $0x98] sm:$0xff]
    %v442 = vld [vmem:[#allocation9 + $0xa0] sm:$0xff]
    %v443 = vld [vmem:[#allocation9 + $0xa8] sm:$0xff]
    %v444 = vld [vmem:[#allocation9 + $0xb0] sm:$0xff]
    %v445 = vld [vmem:[#allocation9 + $0xb8] sm:$0xff]
    %v446 = vld [vmem:[#allocation9 + $0xc0] sm:$0xff]
    %v447 = vld [vmem:[#allocation9 + $0xc8] sm:$0xff]
    %v448 = vld [vmem:[#allocation9 + $0xd0] sm:$0xff]
    %v449 = vld [vmem:[#allocation9 + $0xd8] sm:$0xff]
    %v450 = vld [vmem:[#allocation9 + $0xe0] sm:$0xff]
    %v451 = vld [vmem:[#allocation9 + $0xe8] sm:$0xff]
    %v452 = vld [vmem:[#allocation9 + $0xf0] sm:$0xff]
    %v453 = vld [vmem:[#allocation9 + $0xf8] sm:$0xff]
    %v454 = vld [vmem:[#allocation9 + $0x100] sm:$0xff]
    %v455 = vld [vmem:[#allocation9 + $0x108] sm:$0xff]
    %v456 = vld [vmem:[#allocation9 + $0x110] sm:$0xff]
    %v457 = vld [vmem:[#allocation9 + $0x118] sm:$0xff]
    %v458 = vld [vmem:[#allocation9 + $0x120] sm:$0xff]
    %v459 = vld [vmem:[#allocation9 + $0x128] sm:$0xff]
    %v460 = vld [vmem:[#allocation9 + $0x130] sm:$0xff]
    %v461 = vld [vmem:[#allocation9 + $0x138] sm:$0xff]
    %v462 = vld [vmem:[#allocation9 + $0x140] sm:$0xff]
    %v463 = vld [vmem:[#allocation9 + $0x148] sm:$0xff]
    %v464 = vld [vmem:[#allocation9 + $0x150] sm:$0xff]
    %v465 = vld [vmem:[#allocation9 + $0x158] sm:$0xff]
    %v466 = vld [vmem:[#allocation9 + $0x160] sm:$0xff]
    %v467 = vld [vmem:[#allocation9 + $0x168] sm:$0xff]
    %v468 = vld [vmem:[#allocation9 + $0x170] sm:$0xff]
    %v469 = vld [vmem:[#allocation9 + $0x178] sm:$0xff]
    %v470 = vld [vmem:[#allocation9 + $0x180] sm:$0xff]
    %v471 = vld [vmem:[#allocation9 + $0x188] sm:$0xff]
    %v472 = vld [vmem:[#allocation9 + $0x190] sm:$0xff]
    %v473 = vld [vmem:[#allocation9 + $0x198] sm:$0xff]
    %v474 = vld [vmem:[#allocation9 + $0x1a0] sm:$0xff]
    %v475 = vld [vmem:[#allocation9 + $0x1a8] sm:$0xff]
    %v476 = vld [vmem:[#allocation9 + $0x1b0] sm:$0xff]
    %v477 = vld [vmem:[#allocation9 + $0x1b8] sm:$0xff]
    %v478 = vld [vmem:[#allocation9 + $0x1c0] sm:$0xff]
    %v479 = vld [vmem:[#allocation9 + $0x1c8] sm:$0xff]
    %v480 = vld [vmem:[#allocation9 + $0x1d0] sm:$0xff]
    %v481 = vld [vmem:[#allocation9 + $0x1d8] sm:$0xff]
    %v482 = vld [vmem:[#allocation9 + $0x1e0] sm:$0xff]
    %v483 = vld [vmem:[#allocation9 + $0x1e8] sm:$0xff]
    %v484 = vld [vmem:[#allocation9 + $0x1f0] sm:$0xff]
    %v485 = vld [vmem:[#allocation9 + $0x1f8] sm:$0xff]
    %s486 = smul.u32 0, 256
    %s487 = scalar_lea.vmem [#allocation2], %s486
    %v488 = vld [vmem:[%s487] sm:$0xff]
    %v489 = vld [vmem:[%s487 + $0x8] sm:$0xff]
    %v490 = vld [vmem:[%s487 + $0x10] sm:$0xff]
    %v491 = vld [vmem:[%s487 + $0x18] sm:$0xff]
    %v492 = vld [vmem:[%s487 + $0x20] sm:$0xff]
    %v493 = vld [vmem:[%s487 + $0x28] sm:$0xff]
    %v494 = vld [vmem:[%s487 + $0x30] sm:$0xff]
    %v495 = vld [vmem:[%s487 + $0x38] sm:$0xff]
    %v496 = vld [vmem:[%s487 + $0x40] sm:$0xff]
    %v497 = vld [vmem:[%s487 + $0x48] sm:$0xff]
    %v498 = vld [vmem:[%s487 + $0x50] sm:$0xff]
    %v499 = vld [vmem:[%s487 + $0x58] sm:$0xff]
    %v500 = vld [vmem:[%s487 + $0x60] sm:$0xff]
    %v501 = vld [vmem:[%s487 + $0x68] sm:$0xff]
    %v502 = vld [vmem:[%s487 + $0x70] sm:$0xff]
    %v503 = vld [vmem:[%s487 + $0x78] sm:$0xff]
    %v504 = vld [vmem:[%s487 + $0x80] sm:$0xff]
    %v505 = vld [vmem:[%s487 + $0x88] sm:$0xff]
    %v506 = vld [vmem:[%s487 + $0x90] sm:$0xff]
    %v507 = vld [vmem:[%s487 + $0x98] sm:$0xff]
    %v508 = vld [vmem:[%s487 + $0xa0] sm:$0xff]
    %v509 = vld [vmem:[%s487 + $0xa8] sm:$0xff]
    %v510 = vld [vmem:[%s487 + $0xb0] sm:$0xff]
    %v511 = vld [vmem:[%s487 + $0xb8] sm:$0xff]
    %v512 = vld [vmem:[%s487 + $0xc0] sm:$0xff]
    %v513 = vld [vmem:[%s487 + $0xc8] sm:$0xff]
    %v514 = vld [vmem:[%s487 + $0xd0] sm:$0xff]
    %v515 = vld [vmem:[%s487 + $0xd8] sm:$0xff]
    %v516 = vld [vmem:[%s487 + $0xe0] sm:$0xff]
    %v517 = vld [vmem:[%s487 + $0xe8] sm:$0xff]
    %v518 = vld [vmem:[%s487 + $0xf0] sm:$0xff]
    %v519 = vld [vmem:[%s487 + $0xf8] sm:$0xff]
    %520 = vmatpush.msra.mxu0 %v503
    %521 = vmatpush.msra.mxu0 %v502
    %522 = vmatpush.msra.mxu0 %v501
    %523 = vmatpush.msra.mxu0 %v500
    %524 = vmatpush.msra.mxu0 %v499
    %525 = vmatpush.msra.mxu0 %v498
    %526 = vmatpush.msra.mxu0 %v497
    %527 = vmatpush.msra.mxu0 %v496
    %528 = vmatpush.msra.mxu0 %v495
    %529 = vmatpush.msra.mxu0 %v494
    %530 = vmatpush.msra.mxu0 %v493
    %531 = vmatpush.msra.mxu0 %v492
    %532 = vmatpush.msra.mxu0 %v491
    %533 = vmatpush.msra.mxu0 %v490
    %534 = vmatpush.msra.mxu0 %v489
    %535 = vmatpush.msra.mxu0 %v488
    %536 = vmatmul.f32.gmra.mxu0 %v422
    %v537 = vpop.f32.mrf.mxu0
    %v538 = vadd.f32 0.0, %v537
    %539 = vmatmul.f32.gmra.mxu0 %v424
    %v540 = vpop.f32.mrf.mxu0
    %v541 = vadd.f32 0.0, %v540
    %542 = vmatmul.f32.gmra.mxu0 %v426
    %v543 = vpop.f32.mrf.mxu0
    %v544 = vadd.f32 0.0, %v543
    %545 = vmatmul.f32.gmra.mxu0 %v428
    %v546 = vpop.f32.mrf.mxu0
    %v547 = vadd.f32 0.0, %v546
    %548 = vmatmul.f32.gmra.mxu0 %v430
    %v549 = vpop.f32.mrf.mxu0
    %v550 = vadd.f32 0.0, %v549
    %551 = vmatmul.f32.gmra.mxu0 %v432
    %v552 = vpop.f32.mrf.mxu0
    %v553 = vadd.f32 0.0, %v552
    %554 = vmatmul.f32.gmra.mxu0 %v434
    %v555 = vpop.f32.mrf.mxu0
    %v556 = vadd.f32 0.0, %v555
    %557 = vmatmul.f32.gmra.mxu0 %v436
    %v558 = vpop.f32.mrf.mxu0
    %v559 = vadd.f32 0.0, %v558
    %560 = vmatmul.f32.gmra.mxu0 %v438
    %v561 = vpop.f32.mrf.mxu0
    %v562 = vadd.f32 0.0, %v561
    %563 = vmatmul.f32.gmra.mxu0 %v440
    %v564 = vpop.f32.mrf.mxu0
    %v565 = vadd.f32 0.0, %v564
    %566 = vmatmul.f32.gmra.mxu0 %v442
    %v567 = vpop.f32.mrf.mxu0
    %v568 = vadd.f32 0.0, %v567
    %569 = vmatmul.f32.gmra.mxu0 %v444
    %v570 = vpop.f32.mrf.mxu0
    %v571 = vadd.f32 0.0, %v570
    %572 = vmatmul.f32.gmra.mxu0 %v446
    %v573 = vpop.f32.mrf.mxu0
    %v574 = vadd.f32 0.0, %v573
    %575 = vmatmul.f32.gmra.mxu0 %v448
    %v576 = vpop.f32.mrf.mxu0
    %v577 = vadd.f32 0.0, %v576
    %578 = vmatmul.f32.gmra.mxu0 %v450
    %v579 = vpop.f32.mrf.mxu0
    %v580 = vadd.f32 0.0, %v579
    %581 = vmatmul.f32.gmra.mxu0 %v452
    %v582 = vpop.f32.mrf.mxu0
    %v583 = vadd.f32 0.0, %v582
    %584 = vmatmul.f32.gmra.mxu0 %v454
    %v585 = vpop.f32.mrf.mxu0
    %v586 = vadd.f32 0.0, %v585
    %587 = vmatmul.f32.gmra.mxu0 %v456
    %v588 = vpop.f32.mrf.mxu0
    %v589 = vadd.f32 0.0, %v588
    %590 = vmatmul.f32.gmra.mxu0 %v458
    %v591 = vpop.f32.mrf.mxu0
    %v592 = vadd.f32 0.0, %v591
    %593 = vmatmul.f32.gmra.mxu0 %v460
    %v594 = vpop.f32.mrf.mxu0
    %v595 = vadd.f32 0.0, %v594
    %596 = vmatmul.f32.gmra.mxu0 %v462
    %v597 = vpop.f32.mrf.mxu0
    %v598 = vadd.f32 0.0, %v597
    %599 = vmatmul.f32.gmra.mxu0 %v464
    %v600 = vpop.f32.mrf.mxu0
    %v601 = vadd.f32 0.0, %v600
    %602 = vmatmul.f32.gmra.mxu0 %v466
    %v603 = vpop.f32.mrf.mxu0
    %v604 = vadd.f32 0.0, %v603
    %605 = vmatmul.f32.gmra.mxu0 %v468
    %v606 = vpop.f32.mrf.mxu0
    %v607 = vadd.f32 0.0, %v606
    %608 = vmatmul.f32.gmra.mxu0 %v470
    %v609 = vpop.f32.mrf.mxu0
    %v610 = vadd.f32 0.0, %v609
    %611 = vmatmul.f32.gmra.mxu0 %v472
    %v612 = vpop.f32.mrf.mxu0
    %v613 = vadd.f32 0.0, %v612
    %614 = vmatmul.f32.gmra.mxu0 %v474
    %v615 = vpop.f32.mrf.mxu0
    %v616 = vadd.f32 0.0, %v615
    %617 = vmatmul.f32.gmra.mxu0 %v476
    %v618 = vpop.f32.mrf.mxu0
    %v619 = vadd.f32 0.0, %v618
    %620 = vmatmul.f32.gmra.mxu0 %v478
    %v621 = vpop.f32.mrf.mxu0
    %v622 = vadd.f32 0.0, %v621
    %623 = vmatmul.f32.gmra.mxu0 %v480
    %v624 = vpop.f32.mrf.mxu0
    %v625 = vadd.f32 0.0, %v624
    %626 = vmatmul.f32.gmra.mxu0 %v482
    %v627 = vpop.f32.mrf.mxu0
    %v628 = vadd.f32 0.0, %v627
    %629 = vmatmul.f32.gmra.mxu0 %v484
    %v630 = vpop.f32.mrf.mxu0
    %v631 = vadd.f32 0.0, %v630
    %632 = vdwg.mxu0
    %633 = vmatpush.msra.mxu0 %v519
    %634 = vmatpush.msra.mxu0 %v518
    %635 = vmatpush.msra.mxu0 %v517
    %636 = vmatpush.msra.mxu0 %v516
    %637 = vmatpush.msra.mxu0 %v515
    %638 = vmatpush.msra.mxu0 %v514
    %639 = vmatpush.msra.mxu0 %v513
    %640 = vmatpush.msra.mxu0 %v512
    %641 = vmatpush.msra.mxu0 %v511
    %642 = vmatpush.msra.mxu0 %v510
    %643 = vmatpush.msra.mxu0 %v509
    %644 = vmatpush.msra.mxu0 %v508
    %645 = vmatpush.msra.mxu0 %v507
    %646 = vmatpush.msra.mxu0 %v506
    %647 = vmatpush.msra.mxu0 %v505
    %648 = vmatpush.msra.mxu0 %v504
    %649 = vmatmul.f32.gmra.mxu0 %v423
    %v650 = vpop.f32.mrf.mxu0
    %v651 = vadd.f32 %v538, %v650
    %652 = vmatmul.f32.gmra.mxu0 %v425
    %v653 = vpop.f32.mrf.mxu0
    %v654 = vadd.f32 %v541, %v653
    %655 = vmatmul.f32.gmra.mxu0 %v427
    %v656 = vpop.f32.mrf.mxu0
    %v657 = vadd.f32 %v544, %v656
    %658 = vmatmul.f32.gmra.mxu0 %v429
    %v659 = vpop.f32.mrf.mxu0
    %v660 = vadd.f32 %v547, %v659
    %661 = vmatmul.f32.gmra.mxu0 %v431
    %v662 = vpop.f32.mrf.mxu0
    %v663 = vadd.f32 %v550, %v662
    %664 = vmatmul.f32.gmra.mxu0 %v433
    %v665 = vpop.f32.mrf.mxu0
    %v666 = vadd.f32 %v553, %v665
    %667 = vmatmul.f32.gmra.mxu0 %v435
    %v668 = vpop.f32.mrf.mxu0
    %v669 = vadd.f32 %v556, %v668
    %670 = vmatmul.f32.gmra.mxu0 %v437
    %v671 = vpop.f32.mrf.mxu0
    %v672 = vadd.f32 %v559, %v671
    %673 = vmatmul.f32.gmra.mxu0 %v439
    %v674 = vpop.f32.mrf.mxu0
    %v675 = vadd.f32 %v562, %v674
    %676 = vmatmul.f32.gmra.mxu0 %v441
    %v677 = vpop.f32.mrf.mxu0
    %v678 = vadd.f32 %v565, %v677
    %679 = vmatmul.f32.gmra.mxu0 %v443
    %v680 = vpop.f32.mrf.mxu0
    %v681 = vadd.f32 %v568, %v680
    %682 = vmatmul.f32.gmra.mxu0 %v445
    %v683 = vpop.f32.mrf.mxu0
    %v684 = vadd.f32 %v571, %v683
    %685 = vmatmul.f32.gmra.mxu0 %v447
    %v686 = vpop.f32.mrf.mxu0
    %v687 = vadd.f32 %v574, %v686
    %688 = vmatmul.f32.gmra.mxu0 %v449
    %v689 = vpop.f32.mrf.mxu0
    %v690 = vadd.f32 %v577, %v689
    %691 = vmatmul.f32.gmra.mxu0 %v451
    %v692 = vpop.f32.mrf.mxu0
    %v693 = vadd.f32 %v580, %v692
    %694 = vmatmul.f32.gmra.mxu0 %v453
    %v695 = vpop.f32.mrf.mxu0
    %v696 = vadd.f32 %v583, %v695
    %697 = vmatmul.f32.gmra.mxu0 %v455
    %v698 = vpop.f32.mrf.mxu0
    %v699 = vadd.f32 %v586, %v698
    %700 = vmatmul.f32.gmra.mxu0 %v457
    %v701 = vpop.f32.mrf.mxu0
    %v702 = vadd.f32 %v589, %v701
    %703 = vmatmul.f32.gmra.mxu0 %v459
    %v704 = vpop.f32.mrf.mxu0
    %v705 = vadd.f32 %v592, %v704
    %706 = vmatmul.f32.gmra.mxu0 %v461
    %v707 = vpop.f32.mrf.mxu0
    %v708 = vadd.f32 %v595, %v707
    %709 = vmatmul.f32.gmra.mxu0 %v463
    %v710 = vpop.f32.mrf.mxu0
    %v711 = vadd.f32 %v598, %v710
    %712 = vmatmul.f32.gmra.mxu0 %v465
    %v713 = vpop.f32.mrf.mxu0
    %v714 = vadd.f32 %v601, %v713
    %715 = vmatmul.f32.gmra.mxu0 %v467
    %v716 = vpop.f32.mrf.mxu0
    %v717 = vadd.f32 %v604, %v716
    %718 = vmatmul.f32.gmra.mxu0 %v469
    %v719 = vpop.f32.mrf.mxu0
    %v720 = vadd.f32 %v607, %v719
    %721 = vmatmul.f32.gmra.mxu0 %v471
    %v722 = vpop.f32.mrf.mxu0
    %v723 = vadd.f32 %v610, %v722
    %724 = vmatmul.f32.gmra.mxu0 %v473
    %v725 = vpop.f32.mrf.mxu0
    %v726 = vadd.f32 %v613, %v725
    %727 = vmatmul.f32.gmra.mxu0 %v475
    %v728 = vpop.f32.mrf.mxu0
    %v729 = vadd.f32 %v616, %v728
    %730 = vmatmul.f32.gmra.mxu0 %v477
    %v731 = vpop.f32.mrf.mxu0
    %v732 = vadd.f32 %v619, %v731
    %733 = vmatmul.f32.gmra.mxu0 %v479
    %v734 = vpop.f32.mrf.mxu0
    %v735 = vadd.f32 %v622, %v734
    %736 = vmatmul.f32.gmra.mxu0 %v481
    %v737 = vpop.f32.mrf.mxu0
    %v738 = vadd.f32 %v625, %v737
    %739 = vmatmul.f32.gmra.mxu0 %v483
    %v740 = vpop.f32.mrf.mxu0
    %v741 = vadd.f32 %v628, %v740
    %742 = vmatmul.f32.gmra.mxu0 %v485
    %v743 = vpop.f32.mrf.mxu0
    %v744 = vadd.f32 %v631, %v743
    %745 = vdwg.mxu0
    %p746 = scmp.eq.s32.totalorder 0, 0
    // Predicated region
    $region30: #{tpu_custom_call.1} parent=1 // pred_check
      %p747 = pneg %p746
    $region31: #{tpu_custom_call.1} parent=1 // pred_check_branch
      %749 = sbr.rel (%p747) target = $region33
    $region32: #{tpu_custom_call.1} parent=1 // pred_region
      %750 = vst [vmem:[#allocation3] sm:$0xff] %v651
      %751 = vst [vmem:[#allocation3 + $0x8] sm:$0xff] %v654
      %752 = vst [vmem:[#allocation3 + $0x10] sm:$0xff] %v657
      %753 = vst [vmem:[#allocation3 + $0x18] sm:$0xff] %v660
      %754 = vst [vmem:[#allocation3 + $0x20] sm:$0xff] %v663
      %755 = vst [vmem:[#allocation3 + $0x28] sm:$0xff] %v666
      %756 = vst [vmem:[#allocation3 + $0x30] sm:$0xff] %v669
      %757 = vst [vmem:[#allocation3 + $0x38] sm:$0xff] %v672
      %758 = vst [vmem:[#allocation3 + $0x40] sm:$0xff] %v675
      %759 = vst [vmem:[#allocation3 + $0x48] sm:$0xff] %v678
      %760 = vst [vmem:[#allocation3 + $0x50] sm:$0xff] %v681
      %761 = vst [vmem:[#allocation3 + $0x58] sm:$0xff] %v684
      %762 = vst [vmem:[#allocation3 + $0x60] sm:$0xff] %v687
      %763 = vst [vmem:[#allocation3 + $0x68] sm:$0xff] %v690
      %764 = vst [vmem:[#allocation3 + $0x70] sm:$0xff] %v693
      %765 = vst [vmem:[#allocation3 + $0x78] sm:$0xff] %v696
      %766 = vst [vmem:[#allocation3 + $0x80] sm:$0xff] %v699
      %767 = vst [vmem:[#allocation3 + $0x88] sm:$0xff] %v702
      %768 = vst [vmem:[#allocation3 + $0x90] sm:$0xff] %v705
      %769 = vst [vmem:[#allocation3 + $0x98] sm:$0xff] %v708
      %770 = vst [vmem:[#allocation3 + $0xa0] sm:$0xff] %v711
      %771 = vst [vmem:[#allocation3 + $0xa8] sm:$0xff] %v714
      %772 = vst [vmem:[#allocation3 + $0xb0] sm:$0xff] %v717
      %773 = vst [vmem:[#allocation3 + $0xb8] sm:$0xff] %v720
      %774 = vst [vmem:[#allocation3 + $0xc0] sm:$0xff] %v723
      %775 = vst [vmem:[#allocation3 + $0xc8] sm:$0xff] %v726
      %776 = vst [vmem:[#allocation3 + $0xd0] sm:$0xff] %v729
      %777 = vst [vmem:[#allocation3 + $0xd8] sm:$0xff] %v732
      %778 = vst [vmem:[#allocation3 + $0xe0] sm:$0xff] %v735
      %779 = vst [vmem:[#allocation3 + $0xe8] sm:$0xff] %v738
      %780 = vst [vmem:[#allocation3 + $0xf0] sm:$0xff] %v741
      %781 = vst [vmem:[#allocation3 + $0xf8] sm:$0xff] %v744
    $region33: #{tpu_custom_call.1} parent=1 // pred_fallthru
      _
    %p782 = scmp.gt.s32.totalorder 0, 0
    // Predicated region
    $region34: #{tpu_custom_call.1} parent=1 // pred_check
      %p783 = pneg %p782
    $region35: #{tpu_custom_call.1} parent=1 // pred_check_branch
      %785 = sbr.rel (%p783) target = $region37
    $region36: #{tpu_custom_call.1} parent=1 // pred_region
      %v786 = vld [vmem:[#allocation3] sm:$0xff]
      %v787 = vld [vmem:[#allocation3 + $0x8] sm:$0xff]
      %v788 = vld [vmem:[#allocation3 + $0x10] sm:$0xff]
      %v789 = vld [vmem:[#allocation3 + $0x18] sm:$0xff]
      %v790 = vld [vmem:[#allocation3 + $0x20] sm:$0xff]
      %v791 = vld [vmem:[#allocation3 + $0x28] sm:$0xff]
      %v792 = vld [vmem:[#allocation3 + $0x30] sm:$0xff]
      %v793 = vld [vmem:[#allocation3 + $0x38] sm:$0xff]
      %v794 = vld [vmem:[#allocation3 + $0x40] sm:$0xff]
      %v795 = vld [vmem:[#allocation3 + $0x48] sm:$0xff]
      %v796 = vld [vmem:[#allocation3 + $0x50] sm:$0xff]
      %v797 = vld [vmem:[#allocation3 + $0x58] sm:$0xff]
      %v798 = vld [vmem:[#allocation3 + $0x60] sm:$0xff]
      %v799 = vld [vmem:[#allocation3 + $0x68] sm:$0xff]
      %v800 = vld [vmem:[#allocation3 + $0x70] sm:$0xff]
      %v801 = vld [vmem:[#allocation3 + $0x78] sm:$0xff]
      %v802 = vld [vmem:[#allocation3 + $0x80] sm:$0xff]
      %v803 = vld [vmem:[#allocation3 + $0x88] sm:$0xff]
      %v804 = vld [vmem:[#allocation3 + $0x90] sm:$0xff]
      %v805 = vld [vmem:[#allocation3 + $0x98] sm:$0xff]
      %v806 = vld [vmem:[#allocation3 + $0xa0] sm:$0xff]
      %v807 = vld [vmem:[#allocation3 + $0xa8] sm:$0xff]
      %v808 = vld [vmem:[#allocation3 + $0xb0] sm:$0xff]
      %v809 = vld [vmem:[#allocation3 + $0xb8] sm:$0xff]
      %v810 = vld [vmem:[#allocation3 + $0xc0] sm:$0xff]
      %v811 = vld [vmem:[#allocation3 + $0xc8] sm:$0xff]
      %v812 = vld [vmem:[#allocation3 + $0xd0] sm:$0xff]
      %v813 = vld [vmem:[#allocation3 + $0xd8] sm:$0xff]
      %v814 = vld [vmem:[#allocation3 + $0xe0] sm:$0xff]
      %v815 = vld [vmem:[#allocation3 + $0xe8] sm:$0xff]
      %v816 = vld [vmem:[#allocation3 + $0xf0] sm:$0xff]
      %v817 = vld [vmem:[#allocation3 + $0xf8] sm:$0xff]
      %v818 = vadd.f32 %v786, %v651
      %v819 = vadd.f32 %v787, %v654
      %v820 = vadd.f32 %v788, %v657
      %v821 = vadd.f32 %v789, %v660
      %v822 = vadd.f32 %v790, %v663
      %v823 = vadd.f32 %v791, %v666
      %v824 = vadd.f32 %v792, %v669
      %v825 = vadd.f32 %v793, %v672
      %v826 = vadd.f32 %v794, %v675
      %v827 = vadd.f32 %v795, %v678
      %v828 = vadd.f32 %v796, %v681
      %v829 = vadd.f32 %v797, %v684
      %v830 = vadd.f32 %v798, %v687
      %v831 = vadd.f32 %v799, %v690
      %v832 = vadd.f32 %v800, %v693
      %v833 = vadd.f32 %v801, %v696
      %v834 = vadd.f32 %v802, %v699
      %v835 = vadd.f32 %v803, %v702
      %v836 = vadd.f32 %v804, %v705
      %v837 = vadd.f32 %v805, %v708
      %v838 = vadd.f32 %v806, %v711
      %v839 = vadd.f32 %v807, %v714
      %v840 = vadd.f32 %v808, %v717
      %v841 = vadd.f32 %v809, %v720
      %v842 = vadd.f32 %v810, %v723
      %v843 = vadd.f32 %v811, %v726
      %v844 = vadd.f32 %v812, %v729
      %v845 = vadd.f32 %v813, %v732
      %v846 = vadd.f32 %v814, %v735
      %v847 = vadd.f32 %v815, %v738
      %v848 = vadd.f32 %v816, %v741
      %v849 = vadd.f32 %v817, %v744
      %850 = vst [vmem:[#allocation3] sm:$0xff] %v818
      %851 = vst [vmem:[#allocation3 + $0x8] sm:$0xff] %v819
      %852 = vst [vmem:[#allocation3 + $0x10] sm:$0xff] %v820
      %853 = vst [vmem:[#allocation3 + $0x18] sm:$0xff] %v821
      %854 = vst [vmem:[#allocation3 + $0x20] sm:$0xff] %v822
      %855 = vst [vmem:[#allocation3 + $0x28] sm:$0xff] %v823
      %856 = vst [vmem:[#allocation3 + $0x30] sm:$0xff] %v824
      %857 = vst [vmem:[#allocation3 + $0x38] sm:$0xff] %v825
      %858 = vst [vmem:[#allocation3 + $0x40] sm:$0xff] %v826
      %859 = vst [vmem:[#allocation3 + $0x48] sm:$0xff] %v827
      %860 = vst [vmem:[#allocation3 + $0x50] sm:$0xff] %v828
      %861 = vst [vmem:[#allocation3 + $0x58] sm:$0xff] %v829
      %862 = vst [vmem:[#allocation3 + $0x60] sm:$0xff] %v830
      %863 = vst [vmem:[#allocation3 + $0x68] sm:$0xff] %v831
      %864 = vst [vmem:[#allocation3 + $0x70] sm:$0xff] %v832
      %865 = vst [vmem:[#allocation3 + $0x78] sm:$0xff] %v833
      %866 = vst [vmem:[#allocation3 + $0x80] sm:$0xff] %v834
      %867 = vst [vmem:[#allocation3 + $0x88] sm:$0xff] %v835
      %868 = vst [vmem:[#allocation3 + $0x90] sm:$0xff] %v836
      %869 = vst [vmem:[#allocation3 + $0x98] sm:$0xff] %v837
      %870 = vst [vmem:[#allocation3 + $0xa0] sm:$0xff] %v838
      %871 = vst [vmem:[#allocation3 + $0xa8] sm:$0xff] %v839
      %872 = vst [vmem:[#allocation3 + $0xb0] sm:$0xff] %v840
      %873 = vst [vmem:[#allocation3 + $0xb8] sm:$0xff] %v841
      %874 = vst [vmem:[#allocation3 + $0xc0] sm:$0xff] %v842
      %875 = vst [vmem:[#allocation3 + $0xc8] sm:$0xff] %v843
      %876 = vst [vmem:[#allocation3 + $0xd0] sm:$0xff] %v844
      %877 = vst [vmem:[#allocation3 + $0xd8] sm:$0xff] %v845
      %878 = vst [vmem:[#allocation3 + $0xe0] sm:$0xff] %v846
      %879 = vst [vmem:[#allocation3 + $0xe8] sm:$0xff] %v847
      %880 = vst [vmem:[#allocation3 + $0xf0] sm:$0xff] %v848
      %881 = vst [vmem:[#allocation3 + $0xf8] sm:$0xff] %v849
    $region37: #{tpu_custom_call.1} parent=1 // pred_fallthru
      _
    // Predicated region
    $region38: #{tpu_custom_call.1} parent=1 // pred_check
      %p882 = pneg %p746
    $region39: #{tpu_custom_call.1} parent=1 // pred_check_branch
      %884 = sbr.rel (%p882) target = $region41
    $region40: #{tpu_custom_call.1} parent=1 // pred_region
      %v885 = vld [vmem:[#allocation3] sm:$0xff]
      %v886 = vld [vmem:[#allocation3 + $0x8] sm:$0xff]
      %v887 = vld [vmem:[#allocation3 + $0x10] sm:$0xff]
      %v888 = vld [vmem:[#allocation3 + $0x18] sm:$0xff]
      %v889 = vld [vmem:[#allocation3 + $0x20] sm:$0xff]
      %v890 = vld [vmem:[#allocation3 + $0x28] sm:$0xff]
      %v891 = vld [vmem:[#allocation3 + $0x30] sm:$0xff]
      %v892 = vld [vmem:[#allocation3 + $0x38] sm:$0xff]
      %v893 = vld [vmem:[#allocation3 + $0x40] sm:$0xff]
      %v894 = vld [vmem:[#allocation3 + $0x48] sm:$0xff]
      %v895 = vld [vmem:[#allocation3 + $0x50] sm:$0xff]
      %v896 = vld [vmem:[#allocation3 + $0x58] sm:$0xff]
      %v897 = vld [vmem:[#allocation3 + $0x60] sm:$0xff]
      %v898 = vld [vmem:[#allocation3 + $0x68] sm:$0xff]
      %v899 = vld [vmem:[#allocation3 + $0x70] sm:$0xff]
      %v900 = vld [vmem:[#allocation3 + $0x78] sm:$0xff]
      %v901 = vld [vmem:[#allocation3 + $0x80] sm:$0xff]
      %v902 = vld [vmem:[#allocation3 + $0x88] sm:$0xff]
      %v903 = vld [vmem:[#allocation3 + $0x90] sm:$0xff]
      %v904 = vld [vmem:[#allocation3 + $0x98] sm:$0xff]
      %v905 = vld [vmem:[#allocation3 + $0xa0] sm:$0xff]
      %v906 = vld [vmem:[#allocation3 + $0xa8] sm:$0xff]
      %v907 = vld [vmem:[#allocation3 + $0xb0] sm:$0xff]
      %v908 = vld [vmem:[#allocation3 + $0xb8] sm:$0xff]
      %v909 = vld [vmem:[#allocation3 + $0xc0] sm:$0xff]
      %v910 = vld [vmem:[#allocation3 + $0xc8] sm:$0xff]
      %v911 = vld [vmem:[#allocation3 + $0xd0] sm:$0xff]
      %v912 = vld [vmem:[#allocation3 + $0xd8] sm:$0xff]
      %v913 = vld [vmem:[#allocation3 + $0xe0] sm:$0xff]
      %v914 = vld [vmem:[#allocation3 + $0xe8] sm:$0xff]
      %v915 = vld [vmem:[#allocation3 + $0xf0] sm:$0xff]
      %v916 = vld [vmem:[#allocation3 + $0xf8] sm:$0xff]
      %917 = vst [vmem:[#allocation10] sm:$0xff] %v885
      %918 = vst [vmem:[#allocation10 + $0x8] sm:$0xff] %v886
      %919 = vst [vmem:[#allocation10 + $0x10] sm:$0xff] %v887
      %920 = vst [vmem:[#allocation10 + $0x18] sm:$0xff] %v888
      %921 = vst [vmem:[#allocation10 + $0x20] sm:$0xff] %v889
      %922 = vst [vmem:[#allocation10 + $0x28] sm:$0xff] %v890
      %923 = vst [vmem:[#allocation10 + $0x30] sm:$0xff] %v891
      %924 = vst [vmem:[#allocation10 + $0x38] sm:$0xff] %v892
      %925 = vst [vmem:[#allocation10 + $0x40] sm:$0xff] %v893
      %926 = vst [vmem:[#allocation10 + $0x48] sm:$0xff] %v894
      %927 = vst [vmem:[#allocation10 + $0x50] sm:$0xff] %v895
      %928 = vst [vmem:[#allocation10 + $0x58] sm:$0xff] %v896
      %929 = vst [vmem:[#allocation10 + $0x60] sm:$0xff] %v897
      %930 = vst [vmem:[#allocation10 + $0x68] sm:$0xff] %v898
      %931 = vst [vmem:[#allocation10 + $0x70] sm:$0xff] %v899
      %932 = vst [vmem:[#allocation10 + $0x78] sm:$0xff] %v900
      %933 = vst [vmem:[#allocation10 + $0x80] sm:$0xff] %v901
      %934 = vst [vmem:[#allocation10 + $0x88] sm:$0xff] %v902
      %935 = vst [vmem:[#allocation10 + $0x90] sm:$0xff] %v903
      %936 = vst [vmem:[#allocation10 + $0x98] sm:$0xff] %v904
      %937 = vst [vmem:[#allocation10 + $0xa0] sm:$0xff] %v905
      %938 = vst [vmem:[#allocation10 + $0xa8] sm:$0xff] %v906
      %939 = vst [vmem:[#allocation10 + $0xb0] sm:$0xff] %v907
      %940 = vst [vmem:[#allocation10 + $0xb8] sm:$0xff] %v908
      %941 = vst [vmem:[#allocation10 + $0xc0] sm:$0xff] %v909
      %942 = vst [vmem:[#allocation10 + $0xc8] sm:$0xff] %v910
      %943 = vst [vmem:[#allocation10 + $0xd0] sm:$0xff] %v911
      %944 = vst [vmem:[#allocation10 + $0xd8] sm:$0xff] %v912
      %945 = vst [vmem:[#allocation10 + $0xe0] sm:$0xff] %v913
      %946 = vst [vmem:[#allocation10 + $0xe8] sm:$0xff] %v914
      %947 = vst [vmem:[#allocation10 + $0xf0] sm:$0xff] %v915
      %948 = vst [vmem:[#allocation10 + $0xf8] sm:$0xff] %v916
    $region41: #{tpu_custom_call.1} parent=1 // pred_fallthru
      _
    // Predicated region
    $region42: #{tpu_custom_call.1} parent=1 // pred_check
      _
    $region43: #{tpu_custom_call.1} parent=1 // pred_check_branch
      %950 = sbr.rel (0) target = $region45
    $region44: #{tpu_custom_call.1} parent=1 // pred_region
      %952 = vsyncadd [#allocation6], 0
      %s953 = sshll.u32 [#allocation10], 4
      %s954 = int_to_ptr.vmem [resolvable:$true] %s953
      %s955 = sshll.u32 %s3, 4
      %s956 = int_to_ptr.hbm [resolvable:$true] %s955
      %961 = dma.vmem_to_hbm [thread:$0]  %s954, 4096, %s956, [#allocation6], 128, 128, 8
    $region45: #{tpu_custom_call.1} parent=1 // pred_fallthru
      _
    // Predicated region
    $region46: #{tpu_custom_call.1} parent=1 // pred_check
      _
    $region47: #{tpu_custom_call.1} parent=1 // pred_check_branch
      %963 = sbr.rel (0) target = $region49
    $region48: #{tpu_custom_call.1} parent=1 // pred_region
      %965 = dma.done [#allocation6], 4096
    $region49: #{tpu_custom_call.1} parent=1 // pred_fallthru
      _
    %966 = vsyncpa [#allocation5], 1
    %967 = vsyncpa [#allocation8], 1
    %968 = vsyncpa [#allocation6], 1

</llo_original>
